<compile_context>
chip_gen: v5e
topology: v5e:2x2
jax: 0.10.0
libtpu: 0.0.40
codegen_flags: <defaults>
</compile_context>

<pallas_src>
import jax
import jax.numpy as jnp
from jax.experimental import pallas as pl
from jax.experimental.pallas import tpu as pltpu

HIDDEN = 128
IN_FEATURES = 3


def _round_up(n, m):
    return ((n + m - 1) // m) * m


def decider_kernel(x_ref,
                   w1_ref, b1_ref,
                   w2_ref, b2_ref,
                   w3_ref, b3_ref,
                   w4_ref, b4_ref,
                   o_ref):
    x = x_ref[...]            # (tile_b, 3)   f32
    w1 = w1_ref[...]          # (3, 128)      f32

    # ---- Layer 1 on the VPU: K=3 wastes the systolic array, so do three
    # broadcast mul-adds ((tile_b,1) * (1,128)) instead of an MXU matmul.
    h = (x[:, 0:1] * w1[0:1, :]
         + x[:, 1:2] * w1[1:2, :]
         + x[:, 2:3] * w1[2:3, :]
         + b1_ref[...])
    h = jnp.maximum(h, 0.0)

    # ---- Layers 2 & 3: (tile_b,128) @ (128,128) on the MXU, f32 accumulate.
    h = jnp.dot(h, w2_ref[...], preferred_element_type=jnp.float32) + b2_ref[...]
    h = jnp.maximum(h, 0.0)
    h = jnp.dot(h, w3_ref[...], preferred_element_type=jnp.float32) + b3_ref[...]
    h = jnp.maximum(h, 0.0)

    # ---- Layer 4: weights zero-padded to (128, out_pad) so the output store
    # is lane-dense (no masked partial stores).  Zero columns are sliced away
    # in the wrapper.
    y = jnp.dot(h, w4_ref[...], preferred_element_type=jnp.float32) + b4_ref[...]
    o_ref[...] = y.astype(o_ref.dtype)


def decider_forward(x, params, *, tile_b=256):
    """x: (B, 3) float32.  params: w1..w4 as (in, out), b1..b4 as (1, out)."""
    B = x.shape[0]
    H = HIDDEN
    servo_num = params["w4"].shape[1]

    # Lane-dense padding of the final layer (out features -> multiple of 128).
    out_pad = _round_up(max(servo_num, 1), 128)
    w4p = jnp.zeros((H, out_pad), jnp.float32).at[:, :servo_num].set(params["w4"])
    b4p = jnp.zeros((1, out_pad), jnp.float32).at[:, :servo_num].set(params["b4"])

    # Batch tiling: sublane-aligned tile; pad rows so the grid divides evenly.
    tile = min(tile_b, _round_up(B, 8))
    b_pad = _round_up(B, tile)
    if b_pad != B:
        x = jnp.pad(x, ((0, b_pad - B), (0, 0)))

    grid = (b_pad // tile,)

    def const_spec(shape):
        return pl.BlockSpec(shape, lambda i: tuple(0 for _ in shape))

    flops = 2 * b_pad * (IN_FEATURES * H + H * H + H * H + H * out_pad)
    bytes_accessed = 4 * (x.size
                          + params["w1"].size + params["w2"].size
                          + params["w3"].size + w4p.size
                          + 3 * H + out_pad
                          + b_pad * out_pad)

    out = pl.pallas_call(
        decider_kernel,
        out_shape=jax.ShapeDtypeStruct((b_pad, out_pad), jnp.float32),
        grid_spec=pltpu.PrefetchScalarGridSpec(
            num_scalar_prefetch=0,
            grid=grid,
            in_specs=[
                pl.BlockSpec((tile, IN_FEATURES), lambda i: (i, 0)),  # x rows
                const_spec((IN_FEATURES, H)), const_spec((1, H)),     # w1, b1
                const_spec((H, H)),           const_spec((1, H)),     # w2, b2
                const_spec((H, H)),           const_spec((1, H)),     # w3, b3
                const_spec((H, out_pad)),     const_spec((1, out_pad)),  # w4, b4
            ],
            out_specs=pl.BlockSpec((tile, out_pad), lambda i: (i, 0)),
        ),
        compiler_params=pltpu.CompilerParams(
            dimension_semantics=("parallel",)),
        cost_estimate=pl.CostEstimate(
            flops=flops, transcendentals=0, bytes_accessed=bytes_accessed),
    )(x,
      params["w1"], params["b1"],
      params["w2"], params["b2"],
      params["w3"], params["b3"],
      w4p, b4p)

    return out[:B, :servo_num]


def init_decider_params(key, servo_num):
    """Deterministic init matching nn.Linear's default U(-1/sqrt(fan_in), +)."""
    dims = [(IN_FEATURES, HIDDEN), (HIDDEN, HIDDEN), (HIDDEN, HIDDEN),
            (HIDDEN, servo_num)]
    params = {}
    for idx, (fan_in, fan_out) in enumerate(dims, start=1):
        key, kw, kb = jax.random.split(key, 3)
        bound = 1.0 / jnp.sqrt(jnp.float32(fan_in))
        # Stored already transposed: (in, out)
        params[f"w{idx}"] = jax.random.uniform(
            kw, (fan_in, fan_out), jnp.float32, minval=-bound, maxval=bound)
        params[f"b{idx}"] = jax.random.uniform(
            kb, (1, fan_out), jnp.float32, minval=-bound, maxval=bound)
    return params


def decider_reference(x, params):
    h = jnp.maximum(x @ params["w1"] + params["b1"], 0.0)
    h = jnp.maximum(h @ params["w2"] + params["b2"], 0.0)
    h = jnp.maximum(h @ params["w3"] + params["b3"], 0.0)
    return h @ params["w4"] + params["b4"]


if __name__ == "__main__":
    key = jax.random.PRNGKey(0)
    servo_num = 8

    kx, kp, kx2 = jax.random.split(key, 3)
    params = init_decider_params(kp, servo_num)

    # Small batch (single grid step, B padded only at the sublane level).
    batch = 8
    x = jax.random.normal(kx, (batch, IN_FEATURES), jnp.float32)
    out = jax.block_until_ready(decider_forward(x, params))
    ref = decider_reference(x, params)
    assert out.shape == (batch, servo_num)
    assert jnp.allclose(out, ref, atol=1e-4, rtol=1e-4), "mismatch (B=8)"

    # Larger, non-multiple batch exercises the batch-tiled grid + row padding.
    batch2 = 300
    x2 = jax.random.normal(kx2, (batch2, IN_FEATURES), jnp.float32)
    out2 = jax.block_until_ready(decider_forward(x2, params, tile_b=256))
    ref2 = decider_reference(x2, params)
    assert out2.shape == (batch2, servo_num)
    assert jnp.allclose(out2, ref2, atol=1e-4, rtol=1e-4), "mismatch (B=300)"

    print("KERNEL_OK")
</pallas_src>

<mosaic_0001>
module attributes {stable_mosaic.version = 11 : i64} {
  func.func @decider_kernel(%arg0: i32, %arg1: memref<8x3xf32, #tpu.memory_space<vmem>>, %arg2: memref<3x128xf32, #tpu.memory_space<vmem>>, %arg3: memref<1x128xf32, #tpu.memory_space<vmem>>, %arg4: memref<128x128xf32, #tpu.memory_space<vmem>>, %arg5: memref<1x128xf32, #tpu.memory_space<vmem>>, %arg6: memref<128x128xf32, #tpu.memory_space<vmem>>, %arg7: memref<1x128xf32, #tpu.memory_space<vmem>>, %arg8: memref<128x128xf32, #tpu.memory_space<vmem>>, %arg9: memref<1x128xf32, #tpu.memory_space<vmem>>, %arg10: memref<8x128xf32, #tpu.memory_space<vmem>>) attributes {dimension_semantics = [#tpu.dimension_semantics<parallel>], iteration_bounds = array<i64: 1>, scalar_prefetch = 0 : i64, scratch_operands = 0 : i64, tpu.core_type = #tpu.core_type<tc>, window_params = [{transform_indices = @transform_0, window_bounds = array<i64: 8, 3>}, {pipeline_mode = #tpu.pipeline_mode<synchronous>, transform_indices = @transform_1, window_bounds = array<i64: 3, 128>}, {pipeline_mode = #tpu.pipeline_mode<synchronous>, transform_indices = @transform_2, window_bounds = array<i64: 1, 128>}, {pipeline_mode = #tpu.pipeline_mode<synchronous>, transform_indices = @transform_3, window_bounds = array<i64: 128, 128>}, {pipeline_mode = #tpu.pipeline_mode<synchronous>, transform_indices = @transform_4, window_bounds = array<i64: 1, 128>}, {pipeline_mode = #tpu.pipeline_mode<synchronous>, transform_indices = @transform_5, window_bounds = array<i64: 128, 128>}, {pipeline_mode = #tpu.pipeline_mode<synchronous>, transform_indices = @transform_6, window_bounds = array<i64: 1, 128>}, {pipeline_mode = #tpu.pipeline_mode<synchronous>, transform_indices = @transform_7, window_bounds = array<i64: 128, 128>}, {pipeline_mode = #tpu.pipeline_mode<synchronous>, transform_indices = @transform_8, window_bounds = array<i64: 1, 128>}, {transform_indices = @transform_9, window_bounds = array<i64: 8, 128>}]} {
    %c0 = arith.constant 0 : index
    %c0_0 = arith.constant 0 : index
    %0 = vector.load %arg1[%c0, %c0_0] : memref<8x3xf32, #tpu.memory_space<vmem>>, vector<8x3xf32>
    %c0_1 = arith.constant 0 : index
    %c0_2 = arith.constant 0 : index
    %1 = vector.load %arg2[%c0_1, %c0_2] : memref<3x128xf32, #tpu.memory_space<vmem>>, vector<3x128xf32>
    %2 = vector.extract_strided_slice %0 {offsets = [0, 0], sizes = [8, 1], strides = [1, 1]} : vector<8x3xf32> to vector<8x1xf32>
    %3 = vector.extract_strided_slice %1 {offsets = [0, 0], sizes = [1, 128], strides = [1, 1]} : vector<3x128xf32> to vector<1x128xf32>
    %4 = vector.broadcast %2 : vector<8x1xf32> to vector<8x128xf32>
    %5 = vector.broadcast %3 : vector<1x128xf32> to vector<8x128xf32>
    %6 = arith.mulf %4, %5 : vector<8x128xf32>
    %7 = vector.extract_strided_slice %0 {offsets = [0, 1], sizes = [8, 1], strides = [1, 1]} : vector<8x3xf32> to vector<8x1xf32>
    %8 = vector.extract_strided_slice %1 {offsets = [1, 0], sizes = [1, 128], strides = [1, 1]} : vector<3x128xf32> to vector<1x128xf32>
    %9 = vector.broadcast %7 : vector<8x1xf32> to vector<8x128xf32>
    %10 = vector.broadcast %8 : vector<1x128xf32> to vector<8x128xf32>
    %11 = arith.mulf %9, %10 : vector<8x128xf32>
    %12 = arith.addf %6, %11 : vector<8x128xf32>
    %13 = vector.extract_strided_slice %0 {offsets = [0, 2], sizes = [8, 1], strides = [1, 1]} : vector<8x3xf32> to vector<8x1xf32>
    %14 = vector.extract_strided_slice %1 {offsets = [2, 0], sizes = [1, 128], strides = [1, 1]} : vector<3x128xf32> to vector<1x128xf32>
    %15 = vector.broadcast %13 : vector<8x1xf32> to vector<8x128xf32>
    %16 = vector.broadcast %14 : vector<1x128xf32> to vector<8x128xf32>
    %17 = arith.mulf %15, %16 : vector<8x128xf32>
    %18 = arith.addf %12, %17 : vector<8x128xf32>
    %c0_3 = arith.constant 0 : index
    %c0_4 = arith.constant 0 : index
    %19 = vector.load %arg3[%c0_3, %c0_4] : memref<1x128xf32, #tpu.memory_space<vmem>>, vector<1x128xf32>
    %20 = vector.broadcast %19 : vector<1x128xf32> to vector<8x128xf32>
    %21 = arith.addf %18, %20 : vector<8x128xf32>
    %cst = arith.constant 0.000000e+00 : f32
    %22 = vector.broadcast %cst : f32 to vector<8x128xf32>
    %23 = arith.maximumf %21, %22 : vector<8x128xf32>
    %c0_5 = arith.constant 0 : index
    %c0_6 = arith.constant 0 : index
    %24 = vector.load %arg4[%c0_5, %c0_6] : memref<128x128xf32, #tpu.memory_space<vmem>>, vector<128x128xf32>
    %cst_7 = arith.constant dense<0.000000e+00> : vector<8x128xf32>
    %25 = tpu.matmul %23, %24, %cst_7 {dimension_numbers = #tpu.dot_dimension_numbers<[1], [0], [0], [1], [0, 0, 1, 1], [], []>} : vector<8x128xf32>, vector<128x128xf32>, vector<8x128xf32> -> vector<8x128xf32>
    %c0_8 = arith.constant 0 : index
    %c0_9 = arith.constant 0 : index
    %26 = vector.load %arg5[%c0_8, %c0_9] : memref<1x128xf32, #tpu.memory_space<vmem>>, vector<1x128xf32>
    %27 = vector.broadcast %26 : vector<1x128xf32> to vector<8x128xf32>
    %28 = arith.addf %25, %27 : vector<8x128xf32>
    %cst_10 = arith.constant 0.000000e+00 : f32
    %29 = vector.broadcast %cst_10 : f32 to vector<8x128xf32>
    %30 = arith.maximumf %28, %29 : vector<8x128xf32>
    %c0_11 = arith.constant 0 : index
    %c0_12 = arith.constant 0 : index
    %31 = vector.load %arg6[%c0_11, %c0_12] : memref<128x128xf32, #tpu.memory_space<vmem>>, vector<128x128xf32>
    %cst_13 = arith.constant dense<0.000000e+00> : vector<8x128xf32>
    %32 = tpu.matmul %30, %31, %cst_13 {dimension_numbers = #tpu.dot_dimension_numbers<[1], [0], [0], [1], [0, 0, 1, 1], [], []>} : vector<8x128xf32>, vector<128x128xf32>, vector<8x128xf32> -> vector<8x128xf32>
    %c0_14 = arith.constant 0 : index
    %c0_15 = arith.constant 0 : index
    %33 = vector.load %arg7[%c0_14, %c0_15] : memref<1x128xf32, #tpu.memory_space<vmem>>, vector<1x128xf32>
    %34 = vector.broadcast %33 : vector<1x128xf32> to vector<8x128xf32>
    %35 = arith.addf %32, %34 : vector<8x128xf32>
    %cst_16 = arith.constant 0.000000e+00 : f32
    %36 = vector.broadcast %cst_16 : f32 to vector<8x128xf32>
    %37 = arith.maximumf %35, %36 : vector<8x128xf32>
    %c0_17 = arith.constant 0 : index
    %c0_18 = arith.constant 0 : index
    %38 = vector.load %arg8[%c0_17, %c0_18] : memref<128x128xf32, #tpu.memory_space<vmem>>, vector<128x128xf32>
    %cst_19 = arith.constant dense<0.000000e+00> : vector<8x128xf32>
    %39 = tpu.matmul %37, %38, %cst_19 {dimension_numbers = #tpu.dot_dimension_numbers<[1], [0], [0], [1], [0, 0, 1, 1], [], []>} : vector<8x128xf32>, vector<128x128xf32>, vector<8x128xf32> -> vector<8x128xf32>
    %c0_20 = arith.constant 0 : index
    %c0_21 = arith.constant 0 : index
    %40 = vector.load %arg9[%c0_20, %c0_21] : memref<1x128xf32, #tpu.memory_space<vmem>>, vector<1x128xf32>
    %41 = vector.broadcast %40 : vector<1x128xf32> to vector<8x128xf32>
    %42 = arith.addf %39, %41 : vector<8x128xf32>
    %c0_22 = arith.constant 0 : index
    %c0_23 = arith.constant 0 : index
    %43 = vector.load %arg10[%c0_22, %c0_23] : memref<8x128xf32, #tpu.memory_space<vmem>>, vector<8x128xf32>
    tpu.vector_store %arg10[%c0_22, %c0_23], %42 {strides = array<i32>} : memref<8x128xf32, #tpu.memory_space<vmem>>, vector<8x128xf32>,
    return
  }
  func.func @transform_0(%arg0: i32) -> (i32, i32) {
    %c0_i32 = arith.constant 0 : i32
    %c0_i32_0 = arith.constant 0 : i32
    return %arg0, %c0_i32 : i32, i32
  }
  func.func @transform_1(%arg0: i32) -> (i32, i32) {
    %c0_i32 = arith.constant 0 : i32
    %c0_i32_0 = arith.constant 0 : i32
    %c0_i32_1 = arith.constant 0 : i32
    return %c0_i32, %c0_i32_0 : i32, i32
  }
  func.func @transform_2(%arg0: i32) -> (i32, i32) {
    %c0_i32 = arith.constant 0 : i32
    %c0_i32_0 = arith.constant 0 : i32
    %c0_i32_1 = arith.constant 0 : i32
    return %c0_i32, %c0_i32_0 : i32, i32
  }
  func.func @transform_3(%arg0: i32) -> (i32, i32) {
    %c0_i32 = arith.constant 0 : i32
    %c0_i32_0 = arith.constant 0 : i32
    %c0_i32_1 = arith.constant 0 : i32
    return %c0_i32, %c0_i32_0 : i32, i32
  }
  func.func @transform_4(%arg0: i32) -> (i32, i32) {
    %c0_i32 = arith.constant 0 : i32
    %c0_i32_0 = arith.constant 0 : i32
    %c0_i32_1 = arith.constant 0 : i32
    return %c0_i32, %c0_i32_0 : i32, i32
  }
  func.func @transform_5(%arg0: i32) -> (i32, i32) {
    %c0_i32 = arith.constant 0 : i32
    %c0_i32_0 = arith.constant 0 : i32
    %c0_i32_1 = arith.constant 0 : i32
    return %c0_i32, %c0_i32_0 : i32, i32
  }
  func.func @transform_6(%arg0: i32) -> (i32, i32) {
    %c0_i32 = arith.constant 0 : i32
    %c0_i32_0 = arith.constant 0 : i32
    %c0_i32_1 = arith.constant 0 : i32
    return %c0_i32, %c0_i32_0 : i32, i32
  }
  func.func @transform_7(%arg0: i32) -> (i32, i32) {
    %c0_i32 = arith.constant 0 : i32
    %c0_i32_0 = arith.constant 0 : i32
    %c0_i32_1 = arith.constant 0 : i32
    return %c0_i32, %c0_i32_0 : i32, i32
  }
  func.func @transform_8(%arg0: i32) -> (i32, i32) {
    %c0_i32 = arith.constant 0 : i32
    %c0_i32_0 = arith.constant 0 : i32
    %c0_i32_1 = arith.constant 0 : i32
    return %c0_i32, %c0_i32_0 : i32, i32
  }
  func.func @transform_9(%arg0: i32) -> (i32, i32) {
    %c0_i32 = arith.constant 0 : i32
    %c0_i32_0 = arith.constant 0 : i32
    return %arg0, %c0_i32 : i32, i32
  }
}

</mosaic_0001>

<llo_original>
// kernel: tpu_custom_call.1
$region0: #{tpu_custom_call.1}
  #allocation0 [shape = 'u32[]', space=smem, size = 0x4, offset = 0x4, fixed_abs, tag = 'smem constant byte address 0x4 - core index']
  #allocation1 [shape = 'u32[72,128]{1,0:T(1,128)}', space=vmem, size = 0x9000, scoped, tag = 'internal scratch']
  %s0 = inlined_call_operand.vmem [shape: f32[8,3], index: 0, kind: input, shape index: {}]
  %s1 = inlined_call_operand.vmem [shape: f32[3,128], index: 1, kind: input, shape index: {}]
  %s2 = inlined_call_operand.vmem [shape: f32[1,128], index: 2, kind: input, shape index: {}]
  %s3 = inlined_call_operand.hbm [shape: f32[128,128], index: 3, kind: input, shape index: {}]
  %s4 = inlined_call_operand.vmem [shape: f32[1,128], index: 4, kind: input, shape index: {}]
  %s5 = inlined_call_operand.hbm [shape: f32[128,128], index: 5, kind: input, shape index: {}]
  %s6 = inlined_call_operand.vmem [shape: f32[1,128], index: 6, kind: input, shape index: {}]
  %s7 = inlined_call_operand.hbm [shape: f32[128,128], index: 7, kind: input, shape index: {}]
  %s8 = inlined_call_operand.vmem [shape: f32[1,128], index: 8, kind: input, shape index: {}]
  %s9 = inlined_call_operand.hbm [shape: f32[8,128], index: 9, kind: output, shape index: {}]
  %s10 = sld [smem:[#allocation0]]
  $region58: #{tpu_custom_call.1} parent=0
    _
  %s12 = ssub.s32 1, %s10
  %s13 = scalar_select 0, %s12, %s10
  $region1: #{tpu_custom_call.1} parent=0
    #allocation2 [shape = 'u8[65536]{0}', space=vmem, size = 0x10000, scoped, tag = 'input window, operand 3, single buffered']
    #allocation3 [shape = 's32[1]{0}', space=sflag, size = 0x4, scoped, tag = 'scoped memory for tpu_custom_call.1']
    #allocation4 [shape = 's32[1]{0}', space=sflag, size = 0x4, scoped, tag = 'scoped memory for tpu_custom_call.1']
    #allocation5 [shape = 'u8[65536]{0}', space=vmem, size = 0x10000, scoped, tag = 'input window, operand 5, single buffered']
    #allocation6 [shape = 's32[1]{0}', space=sflag, size = 0x4, scoped, tag = 'scoped memory for tpu_custom_call.1']
    #allocation7 [shape = 'u8[65536]{0}', space=vmem, size = 0x10000, scoped, tag = 'input window, operand 7, single buffered']
    #allocation8 [shape = 'u8[4096]{0}', space=vmem, size = 0x1000, scoped, tag = 'output window, operand 0, single buffered']
    %14 = vsyncpa [#allocation3], 0
    %15 = vsyncpa [#allocation6], 0
    %16 = vsyncpa [#allocation4], 0
    // Predicated region
    $region2: #{tpu_custom_call.1} parent=1 // pred_check
      _
    $region3: #{tpu_custom_call.1} parent=1 // pred_check_branch
      %18 = sbr.rel (0) target = $region5
    $region4: #{tpu_custom_call.1} parent=1 // pred_region
      _
    $region5: #{tpu_custom_call.1} parent=1 // pred_fallthru
      _
    // Predicated region
    $region6: #{tpu_custom_call.1} parent=1 // pred_check
      _
    $region7: #{tpu_custom_call.1} parent=1 // pred_check_branch
      %20 = sbr.rel (0) target = $region9
    $region8: #{tpu_custom_call.1} parent=1 // pred_region
      _
    $region9: #{tpu_custom_call.1} parent=1 // pred_fallthru
      _
    // Predicated region
    $region10: #{tpu_custom_call.1} parent=1 // pred_check
      _
    $region11: #{tpu_custom_call.1} parent=1 // pred_check_branch
      %22 = sbr.rel (0) target = $region13
    $region12: #{tpu_custom_call.1} parent=1 // pred_region
      _
    $region13: #{tpu_custom_call.1} parent=1 // pred_fallthru
      _
    // Predicated region
    $region14: #{tpu_custom_call.1} parent=1 // pred_check
      _
    $region15: #{tpu_custom_call.1} parent=1 // pred_check_branch
      %24 = sbr.rel (0) target = $region17
    $region16: #{tpu_custom_call.1} parent=1 // pred_region
      %26 = vsyncadd [#allocation3], 0
      %s27 = sshll.u32 %s3, 4
      %s28 = int_to_ptr.hbm [resolvable:$true] %s27
      %s29 = sshll.u32 [#allocation2], 4
      %s30 = int_to_ptr.vmem [resolvable:$true] %s29
      %35 = dma.hbm_to_vmem [thread:$0]  %s28, 2048, %s30, [#allocation3], 128, 128, 8
    $region17: #{tpu_custom_call.1} parent=1 // pred_fallthru
      _
    // Predicated region
    $region18: #{tpu_custom_call.1} parent=1 // pred_check
      _
    $region19: #{tpu_custom_call.1} parent=1 // pred_check_branch
      %37 = sbr.rel (0) target = $region21
    $region20: #{tpu_custom_call.1} parent=1 // pred_region
      _
    $region21: #{tpu_custom_call.1} parent=1 // pred_fallthru
      _
    // Predicated region
    $region22: #{tpu_custom_call.1} parent=1 // pred_check
      _
    $region23: #{tpu_custom_call.1} parent=1 // pred_check_branch
      %39 = sbr.rel (0) target = $region25
    $region24: #{tpu_custom_call.1} parent=1 // pred_region
      %41 = vsyncadd [#allocation6], 0
      %s42 = sshll.u32 %s5, 4
      %s43 = int_to_ptr.hbm [resolvable:$true] %s42
      %s44 = sshll.u32 [#allocation5], 4
      %s45 = int_to_ptr.vmem [resolvable:$true] %s44
      %50 = dma.hbm_to_vmem [thread:$0]  %s43, 2048, %s45, [#allocation6], 128, 128, 8
    $region25: #{tpu_custom_call.1} parent=1 // pred_fallthru
      _
    // Predicated region
    $region26: #{tpu_custom_call.1} parent=1 // pred_check
      _
    $region27: #{tpu_custom_call.1} parent=1 // pred_check_branch
      %52 = sbr.rel (0) target = $region29
    $region28: #{tpu_custom_call.1} parent=1 // pred_region
      _
    $region29: #{tpu_custom_call.1} parent=1 // pred_fallthru
      _
    // Predicated region
    $region30: #{tpu_custom_call.1} parent=1 // pred_check
      _
    $region31: #{tpu_custom_call.1} parent=1 // pred_check_branch
      %54 = sbr.rel (0) target = $region33
    $region32: #{tpu_custom_call.1} parent=1 // pred_region
      %56 = vsyncadd [#allocation6], 0
      %s57 = sshll.u32 %s7, 4
      %s58 = int_to_ptr.hbm [resolvable:$true] %s57
      %s59 = sshll.u32 [#allocation7], 4
      %s60 = int_to_ptr.vmem [resolvable:$true] %s59
      %65 = dma.hbm_to_vmem [thread:$0]  %s58, 2048, %s60, [#allocation6], 128, 128, 8
    $region33: #{tpu_custom_call.1} parent=1 // pred_fallthru
      _
    // Predicated region
    $region34: #{tpu_custom_call.1} parent=1 // pred_check
      _
    $region35: #{tpu_custom_call.1} parent=1 // pred_check_branch
      %67 = sbr.rel (0) target = $region37
    $region36: #{tpu_custom_call.1} parent=1 // pred_region
      _
    $region37: #{tpu_custom_call.1} parent=1 // pred_fallthru
      _
    // Predicated region
    $region38: #{tpu_custom_call.1} parent=1 // pred_check
      _
    $region39: #{tpu_custom_call.1} parent=1 // pred_check_branch
      %69 = sbr.rel (0) target = $region41
    $region40: #{tpu_custom_call.1} parent=1 // pred_region
      %71 = dma.done [#allocation3], 2048
    $region41: #{tpu_custom_call.1} parent=1 // pred_fallthru
      _
    // Predicated region
    $region42: #{tpu_custom_call.1} parent=1 // pred_check
      _
    $region43: #{tpu_custom_call.1} parent=1 // pred_check_branch
      %73 = sbr.rel (0) target = $region45
    $region44: #{tpu_custom_call.1} parent=1 // pred_region
      %75 = dma.done [#allocation6], 2048
    $region45: #{tpu_custom_call.1} parent=1 // pred_fallthru
      _
    // Predicated region
    $region46: #{tpu_custom_call.1} parent=1 // pred_check
      _
    $region47: #{tpu_custom_call.1} parent=1 // pred_check_branch
      %77 = sbr.rel (0) target = $region49
    $region48: #{tpu_custom_call.1} parent=1 // pred_region
      %79 = dma.done [#allocation6], 2048
    $region49: #{tpu_custom_call.1} parent=1 // pred_fallthru
      _
    %v80 = vld [vmem:[%s0] sm:$0xff]
    %v81 = vld [vmem:[%s1] sm:$0x7]
    %83 = vset.pattern.permute.xlu0 0
    %84 = vperm.xlu0 %83, %v80
    %v85 = vpop.permute.xlu0 %84
    %v87 = vperm.slane %v81, 0
    %v88 = vmul.f32 %v85, %v87
    %89 = vset.pattern.permute.xlu0 1
    %90 = vperm.xlu0 %89, %v80
    %v91 = vpop.permute.xlu0 %90
    %v93 = vperm.slane %v81, 1
    %v94 = vmul.f32 %v91, %v93
    %v95 = vadd.f32 %v88, %v94
    %96 = vset.pattern.permute.xlu0 2
    %97 = vperm.xlu0 %96, %v80
    %v98 = vpop.permute.xlu0 %97
    %v100 = vperm.slane %v81, 2
    %v101 = vmul.f32 %v98, %v100
    %v102 = vadd.f32 %v95, %v101
    %v103 = vld [vmem:[%s2] sm:$0x1]
    %v105 = vperm.slane %v103, 0
    %v107 = vadd.f32 %v102, %v105
    %v108 = vmax.f32 %v107, 0.0
    %v109 = vld [vmem:[#allocation2] sm:$0xff]
    %v110 = vld [vmem:[#allocation2 + $0x8] sm:$0xff]
    %v111 = vld [vmem:[#allocation2 + $0x10] sm:$0xff]
    %v112 = vld [vmem:[#allocation2 + $0x18] sm:$0xff]
    %v113 = vld [vmem:[#allocation2 + $0x20] sm:$0xff]
    %v114 = vld [vmem:[#allocation2 + $0x28] sm:$0xff]
    %v115 = vld [vmem:[#allocation2 + $0x30] sm:$0xff]
    %v116 = vld [vmem:[#allocation2 + $0x38] sm:$0xff]
    %v117 = vld [vmem:[#allocation2 + $0x40] sm:$0xff]
    %v118 = vld [vmem:[#allocation2 + $0x48] sm:$0xff]
    %v119 = vld [vmem:[#allocation2 + $0x50] sm:$0xff]
    %v120 = vld [vmem:[#allocation2 + $0x58] sm:$0xff]
    %v121 = vld [vmem:[#allocation2 + $0x60] sm:$0xff]
    %v122 = vld [vmem:[#allocation2 + $0x68] sm:$0xff]
    %v123 = vld [vmem:[#allocation2 + $0x70] sm:$0xff]
    %v124 = vld [vmem:[#allocation2 + $0x78] sm:$0xff]
    %v125 = vld [vmem:[%s4] sm:$0x1]
    %v127 = vperm.slane %v125, 0
    %129 = vmatpush.msra.mxu0 %v124
    %130 = vmatpush.msra.mxu0 %v123
    %131 = vmatpush.msra.mxu0 %v122
    %132 = vmatpush.msra.mxu0 %v121
    %133 = vmatpush.msra.mxu0 %v120
    %134 = vmatpush.msra.mxu0 %v119
    %135 = vmatpush.msra.mxu0 %v118
    %136 = vmatpush.msra.mxu0 %v117
    %137 = vmatpush.msra.mxu0 %v116
    %138 = vmatpush.msra.mxu0 %v115
    %139 = vmatpush.msra.mxu0 %v114
    %140 = vmatpush.msra.mxu0 %v113
    %141 = vmatpush.msra.mxu0 %v112
    %142 = vmatpush.msra.mxu0 %v111
    %143 = vmatpush.msra.mxu0 %v110
    %144 = vmatpush.msra.mxu0 %v109
    %145 = vmatmul.f32.gmra.mxu0 %v108
    %v146 = vpop.f32.mrf.mxu0
    %v147 = vadd.f32 %v127, %v146
    %148 = vdwg.mxu0
    %v149 = vmax.f32 %v147, 0.0
    %v150 = vld [vmem:[#allocation5] sm:$0xff]
    %v151 = vld [vmem:[#allocation5 + $0x8] sm:$0xff]
    %v152 = vld [vmem:[#allocation5 + $0x10] sm:$0xff]
    %v153 = vld [vmem:[#allocation5 + $0x18] sm:$0xff]
    %v154 = vld [vmem:[#allocation5 + $0x20] sm:$0xff]
    %v155 = vld [vmem:[#allocation5 + $0x28] sm:$0xff]
    %v156 = vld [vmem:[#allocation5 + $0x30] sm:$0xff]
    %v157 = vld [vmem:[#allocation5 + $0x38] sm:$0xff]
    %v158 = vld [vmem:[#allocation5 + $0x40] sm:$0xff]
    %v159 = vld [vmem:[#allocation5 + $0x48] sm:$0xff]
    %v160 = vld [vmem:[#allocation5 + $0x50] sm:$0xff]
    %v161 = vld [vmem:[#allocation5 + $0x58] sm:$0xff]
    %v162 = vld [vmem:[#allocation5 + $0x60] sm:$0xff]
    %v163 = vld [vmem:[#allocation5 + $0x68] sm:$0xff]
    %v164 = vld [vmem:[#allocation5 + $0x70] sm:$0xff]
    %v165 = vld [vmem:[#allocation5 + $0x78] sm:$0xff]
    %v166 = vld [vmem:[%s6] sm:$0x1]
    %v168 = vperm.slane %v166, 0
    %170 = vmatpush.msra.mxu0 %v165
    %171 = vmatpush.msra.mxu0 %v164
    %172 = vmatpush.msra.mxu0 %v163
    %173 = vmatpush.msra.mxu0 %v162
    %174 = vmatpush.msra.mxu0 %v161
    %175 = vmatpush.msra.mxu0 %v160
    %176 = vmatpush.msra.mxu0 %v159
    %177 = vmatpush.msra.mxu0 %v158
    %178 = vmatpush.msra.mxu0 %v157
    %179 = vmatpush.msra.mxu0 %v156
    %180 = vmatpush.msra.mxu0 %v155
    %181 = vmatpush.msra.mxu0 %v154
    %182 = vmatpush.msra.mxu0 %v153
    %183 = vmatpush.msra.mxu0 %v152
    %184 = vmatpush.msra.mxu0 %v151
    %185 = vmatpush.msra.mxu0 %v150
    %186 = vmatmul.f32.gmra.mxu0 %v149
    %v187 = vpop.f32.mrf.mxu0
    %v188 = vadd.f32 %v168, %v187
    %189 = vdwg.mxu0
    %v190 = vmax.f32 %v188, 0.0
    %v191 = vld [vmem:[#allocation7] sm:$0xff]
    %v192 = vld [vmem:[#allocation7 + $0x8] sm:$0xff]
    %v193 = vld [vmem:[#allocation7 + $0x10] sm:$0xff]
    %v194 = vld [vmem:[#allocation7 + $0x18] sm:$0xff]
    %v195 = vld [vmem:[#allocation7 + $0x20] sm:$0xff]
    %v196 = vld [vmem:[#allocation7 + $0x28] sm:$0xff]
    %v197 = vld [vmem:[#allocation7 + $0x30] sm:$0xff]
    %v198 = vld [vmem:[#allocation7 + $0x38] sm:$0xff]
    %v199 = vld [vmem:[#allocation7 + $0x40] sm:$0xff]
    %v200 = vld [vmem:[#allocation7 + $0x48] sm:$0xff]
    %v201 = vld [vmem:[#allocation7 + $0x50] sm:$0xff]
    %v202 = vld [vmem:[#allocation7 + $0x58] sm:$0xff]
    %v203 = vld [vmem:[#allocation7 + $0x60] sm:$0xff]
    %v204 = vld [vmem:[#allocation7 + $0x68] sm:$0xff]
    %v205 = vld [vmem:[#allocation7 + $0x70] sm:$0xff]
    %v206 = vld [vmem:[#allocation7 + $0x78] sm:$0xff]
    %v207 = vld [vmem:[%s8] sm:$0x1]
    %v209 = vperm.slane %v207, 0
    %211 = vmatpush.msra.mxu0 %v206
    %212 = vmatpush.msra.mxu0 %v205
    %213 = vmatpush.msra.mxu0 %v204
    %214 = vmatpush.msra.mxu0 %v203
    %215 = vmatpush.msra.mxu0 %v202
    %216 = vmatpush.msra.mxu0 %v201
    %217 = vmatpush.msra.mxu0 %v200
    %218 = vmatpush.msra.mxu0 %v199
    %219 = vmatpush.msra.mxu0 %v198
    %220 = vmatpush.msra.mxu0 %v197
    %221 = vmatpush.msra.mxu0 %v196
    %222 = vmatpush.msra.mxu0 %v195
    %223 = vmatpush.msra.mxu0 %v194
    %224 = vmatpush.msra.mxu0 %v193
    %225 = vmatpush.msra.mxu0 %v192
    %226 = vmatpush.msra.mxu0 %v191
    %227 = vmatmul.f32.gmra.mxu0 %v190
    %v228 = vpop.f32.mrf.mxu0
    %v229 = vadd.f32 %v209, %v228
    %230 = vdwg.mxu0
    %231 = vst [vmem:[#allocation8] sm:$0xff] %v229
    // Predicated region
    $region50: #{tpu_custom_call.1} parent=1 // pred_check
      _
    $region51: #{tpu_custom_call.1} parent=1 // pred_check_branch
      %233 = sbr.rel (0) target = $region53
    $region52: #{tpu_custom_call.1} parent=1 // pred_region
      %235 = vsyncadd [#allocation4], 0
      %s237 = sshll.u32 [#allocation8], 4
      %s238 = int_to_ptr.vmem [resolvable:$true] %s237
      %s239 = sshll.u32 %s9, 4
      %s240 = int_to_ptr.hbm [resolvable:$true] %s239
      %242 = dma.vmem_to_hbm [thread:$0]  %s238, 128, %s240, [#allocation4]
    $region53: #{tpu_custom_call.1} parent=1 // pred_fallthru
      _
    // Predicated region
    $region54: #{tpu_custom_call.1} parent=1 // pred_check
      _
    $region55: #{tpu_custom_call.1} parent=1 // pred_check_branch
      %244 = sbr.rel (0) target = $region57
    $region56: #{tpu_custom_call.1} parent=1 // pred_region
      %246 = dma.done [#allocation4], 128
    $region57: #{tpu_custom_call.1} parent=1 // pred_fallthru
      _
    %247 = vsyncpa [#allocation3], 1
    %248 = vsyncpa [#allocation6], 1
    %249 = vsyncpa [#allocation4], 1

</llo_original>
